<compile_context>
chip_gen: v6e
topology: v6e:2x2x1
jax: 0.10.0
libtpu: 0.0.40
codegen_flags: <defaults>
</compile_context>

<pallas_src>
import functools

import jax
import jax.numpy as jnp
from jax.experimental import pallas as pl
from jax.experimental.pallas import tpu as pltpu

LANE = 128


def _round_up(n, m):
    return ((n + m - 1) // m) * m


def _mlp_kernel(x_ref, w1_ref, b1_ref, w2_ref, b2_ref, w3_ref, b3_ref, o_ref):
    """Fused 3-layer MLP on one (TILE_M, F) batch tile.

    Matmul operands are bf16, accumulation + elementwise stay in f32.
    Dropout(0.2) is identity at inference time.
    """
    x = x_ref[...]  # (TILE_M, F) bf16

    # Layer 1: Linear(F -> 128) + ReLU
    h1 = jnp.dot(x, w1_ref[...], preferred_element_type=jnp.float32) + b1_ref[...]
    h1 = jnp.maximum(h1, 0.0)

    # Layer 2: Linear(128 -> 64, padded to 128 cols) + ReLU
    h2 = jnp.dot(h1.astype(w2_ref.dtype), w2_ref[...],
                 preferred_element_type=jnp.float32) + b2_ref[...]
    h2 = jnp.maximum(h2, 0.0)

    # Layer 3: Linear(64 -> num_tactics, padded to 128 cols) + Sigmoid
    h3 = jnp.dot(h2.astype(w3_ref.dtype), w3_ref[...],
                 preferred_element_type=jnp.float32) + b3_ref[...]
    o_ref[...] = jax.nn.sigmoid(h3).astype(o_ref.dtype)


def tactical_analysis_forward(x, params, tile_m=512):
    """x: (B, input_features) float32. params: dict of f32 weights/biases."""
    w1, b1 = params["w1"], params["b1"]
    w2, b2 = params["w2"], params["b2"]
    w3, b3 = params["w3"], params["b3"]

    B, F_in = x.shape
    H2 = w2.shape[1]            # 64
    num_tactics = w3.shape[1]   # 12

    # ---- lane-dense padding of the narrow column dims (zeros preserve math) ----
    H2p = _round_up(H2, LANE)           # 64  -> 128
    Np = _round_up(num_tactics, LANE)   # 12  -> 128
    w2p = jnp.pad(w2, ((0, 0), (0, H2p - H2)))
    b2p = jnp.pad(b2, ((0, 0), (0, H2p - H2)))
    w3p = jnp.pad(w3, ((0, H2p - H2), (0, Np - num_tactics)))
    b3p = jnp.pad(b3, ((0, 0), (0, Np - num_tactics)))

    # ---- batch tiling: multiples of 128 rows, TILE_M<=tile_m, pipelined grid ----
    tm = min(tile_m, _round_up(B, LANE))
    B_pad = _round_up(B, tm)
    if B_pad != B:
        x = jnp.pad(x, ((0, B_pad - B), (0, 0)))
    nb = B_pad // tm

    # ---- bf16 MXU operands; biases stay f32 ----
    xb = x.astype(jnp.bfloat16)
    w1b = w1.astype(jnp.bfloat16)
    w2b = w2p.astype(jnp.bfloat16)
    w3b = w3p.astype(jnp.bfloat16)

    resident = lambda shape: pl.BlockSpec(shape, lambda i: (0, 0))

    out = pl.pallas_call(
        _mlp_kernel,
        out_shape=jax.ShapeDtypeStruct((B_pad, Np), jnp.float32),
        grid_spec=pltpu.PrefetchScalarGridSpec(
            num_scalar_prefetch=0,
            grid=(nb,),
            in_specs=[
                pl.BlockSpec((tm, F_in), lambda i: (i, 0)),   # x: batch-tiled
                resident(w1b.shape), resident(b1.shape),      # params: VMEM-resident
                resident(w2b.shape), resident(b2p.shape),
                resident(w3b.shape), resident(b3p.shape),
            ],
            out_specs=pl.BlockSpec((tm, Np), lambda i: (i, 0)),
        ),
        compiler_params=pltpu.CompilerParams(
            dimension_semantics=("parallel",)),
    )(xb, w1b, b1, w2b, b2p, w3b, b3p)

    # Padded lanes hold sigmoid(0)=0.5; padded rows are garbage — slice both off.
    return out[:B, :num_tactics]


def reference_forward(x, params):
    """Pure-jnp f32 reference of the PyTorch module (eval mode)."""
    h1 = jnp.maximum(x @ params["w1"] + params["b1"], 0.0)
    h2 = jnp.maximum(h1 @ params["w2"] + params["b2"], 0.0)
    return jax.nn.sigmoid(h2 @ params["w3"] + params["b3"])


def init_params(key, input_features=64, num_tactics=12):
    """Deterministic synthetic parameters (Kaiming-uniform-ish like nn.Linear)."""
    ks = jax.random.split(key, 6)

    def linear(kw, kb, fan_in, fan_out):
        bound = 1.0 / jnp.sqrt(fan_in)
        w = jax.random.uniform(kw, (fan_in, fan_out), jnp.float32, -bound, bound)
        b = jax.random.uniform(kb, (1, fan_out), jnp.float32, -bound, bound)
        return w, b

    w1, b1 = linear(ks[0], ks[1], input_features, 128)
    w2, b2 = linear(ks[2], ks[3], 128, 64)
    w3, b3 = linear(ks[4], ks[5], 64, num_tactics)
    return {"w1": w1, "b1": b1, "w2": w2, "b2": b2, "w3": w3, "b3": b3}


if __name__ == "__main__":
    key = jax.random.PRNGKey(0)
    k_params, k_x = jax.random.split(key)

    input_features = 64
    num_tactics = 12
    batch = 8

    params = init_params(k_params, input_features, num_tactics)
    x = jax.random.normal(k_x, (batch, input_features), dtype=jnp.float32)

    fwd = jax.jit(functools.partial(tactical_analysis_forward, tile_m=512))
    out = jax.block_until_ready(fwd(x, params))

    assert out.shape == (batch, num_tactics)
    assert bool(jnp.all((out >= 0.0) & (out <= 1.0)))  # sigmoid range sanity

    ref = reference_forward(x, params)
    assert bool(jnp.allclose(out, ref, atol=2e-2, rtol=0.0)), "mismatch vs f32 reference"

    print("KERNEL_OK")
</pallas_src>

<mosaic_0001>
module attributes {stable_mosaic.version = 11 : i64} {
  func.func @_mlp_kernel(%arg0: i32, %arg1: memref<128x64xbf16, #tpu.memory_space<vmem>>, %arg2: memref<64x128xbf16, #tpu.memory_space<vmem>>, %arg3: memref<1x128xf32, #tpu.memory_space<vmem>>, %arg4: memref<128x128xbf16, #tpu.memory_space<vmem>>, %arg5: memref<1x128xf32, #tpu.memory_space<vmem>>, %arg6: memref<128x128xbf16, #tpu.memory_space<vmem>>, %arg7: memref<1x128xf32, #tpu.memory_space<vmem>>, %arg8: memref<128x128xf32, #tpu.memory_space<vmem>>) attributes {dimension_semantics = [#tpu.dimension_semantics<parallel>], iteration_bounds = array<i64: 1>, scalar_prefetch = 0 : i64, scratch_operands = 0 : i64, tpu.core_type = #tpu.core_type<tc>, window_params = [{transform_indices = @transform_0, window_bounds = array<i64: 128, 64>}, {pipeline_mode = #tpu.pipeline_mode<synchronous>, transform_indices = @transform_1, window_bounds = array<i64: 64, 128>}, {pipeline_mode = #tpu.pipeline_mode<synchronous>, transform_indices = @transform_2, window_bounds = array<i64: 1, 128>}, {pipeline_mode = #tpu.pipeline_mode<synchronous>, transform_indices = @transform_3, window_bounds = array<i64: 128, 128>}, {pipeline_mode = #tpu.pipeline_mode<synchronous>, transform_indices = @transform_4, window_bounds = array<i64: 1, 128>}, {pipeline_mode = #tpu.pipeline_mode<synchronous>, transform_indices = @transform_5, window_bounds = array<i64: 128, 128>}, {pipeline_mode = #tpu.pipeline_mode<synchronous>, transform_indices = @transform_6, window_bounds = array<i64: 1, 128>}, {transform_indices = @transform_7, window_bounds = array<i64: 128, 128>}]} {
    %c0 = arith.constant 0 : index
    %c0_0 = arith.constant 0 : index
    %0 = vector.load %arg1[%c0, %c0_0] : memref<128x64xbf16, #tpu.memory_space<vmem>>, vector<128x64xbf16>
    %c0_1 = arith.constant 0 : index
    %c0_2 = arith.constant 0 : index
    %1 = vector.load %arg2[%c0_1, %c0_2] : memref<64x128xbf16, #tpu.memory_space<vmem>>, vector<64x128xbf16>
    %cst = arith.constant dense<0.000000e+00> : vector<128x128xf32>
    %2 = tpu.matmul %0, %1, %cst {dimension_numbers = #tpu.dot_dimension_numbers<[1], [0], [0], [1], [0, 0, 1, 1], [], []>} : vector<128x64xbf16>, vector<64x128xbf16>, vector<128x128xf32> -> vector<128x128xf32>
    %c0_3 = arith.constant 0 : index
    %c0_4 = arith.constant 0 : index
    %3 = vector.load %arg3[%c0_3, %c0_4] : memref<1x128xf32, #tpu.memory_space<vmem>>, vector<1x128xf32>
    %4 = vector.broadcast %3 : vector<1x128xf32> to vector<128x128xf32>
    %5 = arith.addf %2, %4 : vector<128x128xf32>
    %cst_5 = arith.constant 0.000000e+00 : f32
    %6 = vector.broadcast %cst_5 : f32 to vector<128x128xf32>
    %7 = arith.maximumf %5, %6 : vector<128x128xf32>
    %8 = arith.truncf %7 : vector<128x128xf32> to vector<128x128xbf16>
    %c0_6 = arith.constant 0 : index
    %c0_7 = arith.constant 0 : index
    %9 = vector.load %arg4[%c0_6, %c0_7] : memref<128x128xbf16, #tpu.memory_space<vmem>>, vector<128x128xbf16>
    %cst_8 = arith.constant dense<0.000000e+00> : vector<128x128xf32>
    %10 = tpu.matmul %8, %9, %cst_8 {dimension_numbers = #tpu.dot_dimension_numbers<[1], [0], [0], [1], [0, 0, 1, 1], [], []>} : vector<128x128xbf16>, vector<128x128xbf16>, vector<128x128xf32> -> vector<128x128xf32>
    %c0_9 = arith.constant 0 : index
    %c0_10 = arith.constant 0 : index
    %11 = vector.load %arg5[%c0_9, %c0_10] : memref<1x128xf32, #tpu.memory_space<vmem>>, vector<1x128xf32>
    %12 = vector.broadcast %11 : vector<1x128xf32> to vector<128x128xf32>
    %13 = arith.addf %10, %12 : vector<128x128xf32>
    %cst_11 = arith.constant 0.000000e+00 : f32
    %14 = vector.broadcast %cst_11 : f32 to vector<128x128xf32>
    %15 = arith.maximumf %13, %14 : vector<128x128xf32>
    %16 = arith.truncf %15 : vector<128x128xf32> to vector<128x128xbf16>
    %c0_12 = arith.constant 0 : index
    %c0_13 = arith.constant 0 : index
    %17 = vector.load %arg6[%c0_12, %c0_13] : memref<128x128xbf16, #tpu.memory_space<vmem>>, vector<128x128xbf16>
    %cst_14 = arith.constant dense<0.000000e+00> : vector<128x128xf32>
    %18 = tpu.matmul %16, %17, %cst_14 {dimension_numbers = #tpu.dot_dimension_numbers<[1], [0], [0], [1], [0, 0, 1, 1], [], []>} : vector<128x128xbf16>, vector<128x128xbf16>, vector<128x128xf32> -> vector<128x128xf32>
    %c0_15 = arith.constant 0 : index
    %c0_16 = arith.constant 0 : index
    %19 = vector.load %arg7[%c0_15, %c0_16] : memref<1x128xf32, #tpu.memory_space<vmem>>, vector<1x128xf32>
    %20 = vector.broadcast %19 : vector<1x128xf32> to vector<128x128xf32>
    %21 = arith.addf %18, %20 : vector<128x128xf32>
    %22 = arith.negf %21 : vector<128x128xf32>
    %23 = math.exp %22 : vector<128x128xf32>
    %cst_17 = arith.constant 1.000000e+00 : f32
    %24 = vector.broadcast %cst_17 : f32 to vector<128x128xf32>
    %25 = arith.addf %24, %23 : vector<128x128xf32>
    %26 = arith.divf %24, %25 : vector<128x128xf32>
    %c0_18 = arith.constant 0 : index
    %c0_19 = arith.constant 0 : index
    %27 = vector.load %arg8[%c0_18, %c0_19] : memref<128x128xf32, #tpu.memory_space<vmem>>, vector<128x128xf32>
    tpu.vector_store %arg8[%c0_18, %c0_19], %26 {strides = array<i32>} : memref<128x128xf32, #tpu.memory_space<vmem>>, vector<128x128xf32>,
    return
  }
  func.func @transform_0(%arg0: i32) -> (i32, i32) {
    %c0_i32 = arith.constant 0 : i32
    %c0_i32_0 = arith.constant 0 : i32
    return %arg0, %c0_i32 : i32, i32
  }
  func.func @transform_1(%arg0: i32) -> (i32, i32) {
    %c0_i32 = arith.constant 0 : i32
    %c0_i32_0 = arith.constant 0 : i32
    %c0_i32_1 = arith.constant 0 : i32
    return %c0_i32, %c0_i32_0 : i32, i32
  }
  func.func @transform_2(%arg0: i32) -> (i32, i32) {
    %c0_i32 = arith.constant 0 : i32
    %c0_i32_0 = arith.constant 0 : i32
    %c0_i32_1 = arith.constant 0 : i32
    return %c0_i32, %c0_i32_0 : i32, i32
  }
  func.func @transform_3(%arg0: i32) -> (i32, i32) {
    %c0_i32 = arith.constant 0 : i32
    %c0_i32_0 = arith.constant 0 : i32
    %c0_i32_1 = arith.constant 0 : i32
    return %c0_i32, %c0_i32_0 : i32, i32
  }
  func.func @transform_4(%arg0: i32) -> (i32, i32) {
    %c0_i32 = arith.constant 0 : i32
    %c0_i32_0 = arith.constant 0 : i32
    %c0_i32_1 = arith.constant 0 : i32
    return %c0_i32, %c0_i32_0 : i32, i32
  }
  func.func @transform_5(%arg0: i32) -> (i32, i32) {
    %c0_i32 = arith.constant 0 : i32
    %c0_i32_0 = arith.constant 0 : i32
    %c0_i32_1 = arith.constant 0 : i32
    return %c0_i32, %c0_i32_0 : i32, i32
  }
  func.func @transform_6(%arg0: i32) -> (i32, i32) {
    %c0_i32 = arith.constant 0 : i32
    %c0_i32_0 = arith.constant 0 : i32
    %c0_i32_1 = arith.constant 0 : i32
    return %c0_i32, %c0_i32_0 : i32, i32
  }
  func.func @transform_7(%arg0: i32) -> (i32, i32) {
    %c0_i32 = arith.constant 0 : i32
    %c0_i32_0 = arith.constant 0 : i32
    return %arg0, %c0_i32 : i32, i32
  }
}

</mosaic_0001>

<llo_original>
// kernel: tactical_analysis_forward.1
$region0: #{tactical_analysis_forward.1}
  #allocation0 [shape = 'u32[]', space=smem, size = 0x4, offset = 0x4, fixed_abs, tag = 'smem constant byte address 0x4 - core index']
  #allocation1 [shape = 'u32[144,128]{1,0:T(1,128)}', space=vmem, size = 0x12000, scoped, tag = 'internal scratch']
  %s0 = inlined_call_operand.vmem [shape: bf16[128,64], index: 0, kind: input, shape index: {}]
  %s1 = inlined_call_operand.vmem [shape: bf16[64,128], index: 1, kind: input, shape index: {}]
  %s2 = inlined_call_operand.vmem [shape: f32[1,128], index: 2, kind: input, shape index: {}]
  %s3 = inlined_call_operand.vmem [shape: bf16[128,128], index: 3, kind: input, shape index: {}]
  %s4 = inlined_call_operand.vmem [shape: f32[1,128], index: 4, kind: input, shape index: {}]
  %s5 = inlined_call_operand.vmem [shape: bf16[128,128], index: 5, kind: input, shape index: {}]
  %s6 = inlined_call_operand.vmem [shape: f32[1,128], index: 6, kind: input, shape index: {}]
  %s7 = inlined_call_operand.vmem [shape: f32[128,128], index: 7, kind: output, shape index: {}]
  %s8 = sld [smem:[#allocation0]]
  $region38: #{tactical_analysis_forward.1} parent=0
    _
  %s10 = ssub.s32 1, %s8
  %s11 = scalar_select 0, %s10, %s8
  // Predicated region
  $region2: #{tactical_analysis_forward.1} parent=0 // pred_check
    _
  $region3: #{tactical_analysis_forward.1} parent=0 // pred_check_branch
    %13 = sbr.rel (0) target = $region5
  $region4: #{tactical_analysis_forward.1} parent=0 // pred_region
    _
  $region5: #{tactical_analysis_forward.1} parent=0 // pred_fallthru
    _
  // Predicated region
  $region6: #{tactical_analysis_forward.1} parent=0 // pred_check
    _
  $region7: #{tactical_analysis_forward.1} parent=0 // pred_check_branch
    %15 = sbr.rel (0) target = $region9
  $region8: #{tactical_analysis_forward.1} parent=0 // pred_region
    _
  $region9: #{tactical_analysis_forward.1} parent=0 // pred_fallthru
    _
  // Predicated region
  $region10: #{tactical_analysis_forward.1} parent=0 // pred_check
    _
  $region11: #{tactical_analysis_forward.1} parent=0 // pred_check_branch
    %17 = sbr.rel (0) target = $region13
  $region12: #{tactical_analysis_forward.1} parent=0 // pred_region
    _
  $region13: #{tactical_analysis_forward.1} parent=0 // pred_fallthru
    _
  // Predicated region
  $region14: #{tactical_analysis_forward.1} parent=0 // pred_check
    _
  $region15: #{tactical_analysis_forward.1} parent=0 // pred_check_branch
    %19 = sbr.rel (0) target = $region17
  $region16: #{tactical_analysis_forward.1} parent=0 // pred_region
    _
  $region17: #{tactical_analysis_forward.1} parent=0 // pred_fallthru
    _
  // Predicated region
  $region18: #{tactical_analysis_forward.1} parent=0 // pred_check
    _
  $region19: #{tactical_analysis_forward.1} parent=0 // pred_check_branch
    %21 = sbr.rel (0) target = $region21
  $region20: #{tactical_analysis_forward.1} parent=0 // pred_region
    _
  $region21: #{tactical_analysis_forward.1} parent=0 // pred_fallthru
    _
  // Predicated region
  $region22: #{tactical_analysis_forward.1} parent=0 // pred_check
    _
  $region23: #{tactical_analysis_forward.1} parent=0 // pred_check_branch
    %23 = sbr.rel (0) target = $region25
  $region24: #{tactical_analysis_forward.1} parent=0 // pred_region
    _
  $region25: #{tactical_analysis_forward.1} parent=0 // pred_fallthru
    _
  // Predicated region
  $region26: #{tactical_analysis_forward.1} parent=0 // pred_check
    _
  $region27: #{tactical_analysis_forward.1} parent=0 // pred_check_branch
    %25 = sbr.rel (0) target = $region29
  $region28: #{tactical_analysis_forward.1} parent=0 // pred_region
    _
  $region29: #{tactical_analysis_forward.1} parent=0 // pred_fallthru
    _
  %v27 = vld [vmem:[%s0] sm:$0xf]
  %v28 = vld [vmem:[%s0 + $0x4] sm:$0xf]
  %v29 = vld [vmem:[%s0 + $0x8] sm:$0xf]
  %v30 = vld [vmem:[%s0 + $0xc] sm:$0xf]
  %v31 = vld [vmem:[%s0 + $0x10] sm:$0xf]
  %v32 = vld [vmem:[%s0 + $0x14] sm:$0xf]
  %v33 = vld [vmem:[%s0 + $0x18] sm:$0xf]
  %v34 = vld [vmem:[%s0 + $0x1c] sm:$0xf]
  %v35 = vld [vmem:[%s0 + $0x20] sm:$0xf]
  %v36 = vld [vmem:[%s0 + $0x24] sm:$0xf]
  %v37 = vld [vmem:[%s0 + $0x28] sm:$0xf]
  %v38 = vld [vmem:[%s0 + $0x2c] sm:$0xf]
  %v39 = vld [vmem:[%s0 + $0x30] sm:$0xf]
  %v40 = vld [vmem:[%s0 + $0x34] sm:$0xf]
  %v41 = vld [vmem:[%s0 + $0x38] sm:$0xf]
  %v42 = vld [vmem:[%s0 + $0x3c] sm:$0xf]
  %v43 = vld [vmem:[%s1] sm:$0xf]
  %v44 = vld [vmem:[%s1 + $0x4] sm:$0xf]
  %v45 = vld [vmem:[%s1 + $0x8] sm:$0xf]
  %v46 = vld [vmem:[%s1 + $0xc] sm:$0xf]
  %v47 = vld [vmem:[%s1 + $0x10] sm:$0xf]
  %v48 = vld [vmem:[%s1 + $0x14] sm:$0xf]
  %v49 = vld [vmem:[%s1 + $0x18] sm:$0xf]
  %v50 = vld [vmem:[%s1 + $0x1c] sm:$0xf]
  %v51 = vld [vmem:[%s2] sm:$0x1]
  %v53 = vlaneseq
  %v54 = vshrl.u32 %v53, 7
  %v55 = vsub.s32 0, %v54
  %v56 = vrot.slane %v51, %v55
  %v74 = vunpack.c.l.b16 %v27
  %v75 = vunpack.c.l.b16 %v28
  %v76 = vunpack.c.l.b16 %v29
  %v77 = vunpack.c.l.b16 %v30
  %v78 = vunpack.c.l.b16 %v31
  %v79 = vunpack.c.l.b16 %v32
  %v80 = vunpack.c.l.b16 %v33
  %v81 = vunpack.c.l.b16 %v34
  %v82 = vunpack.c.l.b16 %v35
  %v83 = vunpack.c.l.b16 %v36
  %v84 = vunpack.c.l.b16 %v37
  %v85 = vunpack.c.l.b16 %v38
  %v86 = vunpack.c.l.b16 %v39
  %v87 = vunpack.c.l.b16 %v40
  %v88 = vunpack.c.l.b16 %v41
  %v89 = vunpack.c.l.b16 %v42
  %v90 = vpack.c.b16 %v75, %v74
  %v91 = vpack.c.b16 %v77, %v76
  %v92 = vpack.c.b16 %v79, %v78
  %v93 = vpack.c.b16 %v81, %v80
  %v94 = vpack.c.b16 %v83, %v82
  %v95 = vpack.c.b16 %v85, %v84
  %v96 = vpack.c.b16 %v87, %v86
  %v97 = vpack.c.b16 %v89, %v88
  %v106 = vunpack.c.l.b16 %v43
  %v107 = vunpack.c.l.b16 %v44
  %v108 = vunpack.c.l.b16 %v45
  %v109 = vunpack.c.l.b16 %v46
  %v110 = vunpack.c.l.b16 %v47
  %v111 = vunpack.c.l.b16 %v48
  %v112 = vunpack.c.l.b16 %v49
  %v113 = vunpack.c.l.b16 %v50
  %v114 = vpack.c.b16 %v107, %v106
  %v115 = vpack.c.b16 %v109, %v108
  %v116 = vpack.c.b16 %v111, %v110
  %v117 = vpack.c.b16 %v113, %v112
  %vm122 = vcmask 523264
  %v124 = vsel %vm122, %v90, 0
  %v127 = vsel %vm122, %v91, 0
  %v130 = vsel %vm122, %v92, 0
  %v133 = vsel %vm122, %v93, 0
  %v136 = vsel %vm122, %v94, 0
  %v139 = vsel %vm122, %v95, 0
  %v142 = vsel %vm122, %v96, 0
  %v145 = vsel %vm122, %v97, 0
  %147 = vmatprep.subr.bf16.mxu0 0
  %148 = vmatpush1.bf16.msra.mxu0 0
  %149 = vmatprep.subr.bf16.mxu0 0
  %150 = vmatpush1.bf16.msra.mxu0 0
  %151 = vmatprep.subr.bf16.mxu0 0
  %152 = vmatpush1.bf16.msra.mxu0 0
  %153 = vmatprep.subr.bf16.mxu0 0
  %154 = vmatpush1.bf16.msra.mxu0 0
  %155 = vmatprep.subr.bf16.mxu0 0
  %156 = vmatpush1.bf16.msra.mxu0 %v117
  %157 = vmatprep.subr.bf16.mxu0 0
  %158 = vmatpush1.bf16.msra.mxu0 %v116
  %159 = vmatprep.subr.bf16.mxu0 0
  %160 = vmatpush1.bf16.msra.mxu0 %v115
  %161 = vmatprep.subr.bf16.mxu0 0
  %162 = vmatpush1.bf16.msra.mxu0 %v114
  %163 = vmatprep.subr.bf16.mxu0 0
  %164 = vmatpush2.bf16.msra.mxu0 0
  %165 = vmatprep.subr.bf16.mxu0 0
  %166 = vmatpush2.bf16.msra.mxu0 0
  %167 = vmatprep.subr.bf16.mxu0 0
  %168 = vmatpush2.bf16.msra.mxu0 0
  %169 = vmatprep.subr.bf16.mxu0 0
  %170 = vmatpush2.bf16.msra.mxu0 0
  %171 = vmatprep.subr.bf16.mxu0 0
  %172 = vmatpush2.bf16.msra.mxu0 0
  %173 = vmatprep.subr.bf16.mxu0 0
  %174 = vmatpush2.bf16.msra.mxu0 0
  %175 = vmatprep.subr.bf16.mxu0 0
  %176 = vmatpush2.bf16.msra.mxu0 0
  %177 = vmatprep.subr.bf16.mxu0 0
  %178 = vmatpush2.bf16.msra.mxu0 0
  %179 = vmatprep.mubr.bf16.mxu0 0
  %180 = vmatmul.mubr.bf16.gmra.mxu0 %v124
  %v181 = vpop.f32.mrf.mxu0
  %v182 = vadd.f32 %v56, %v181
  %v183 = vpop.f32.mrf.mxu0
  %v184 = vpop.f32.mrf.mxu0
  %v185 = vadd.f32 %v56, %v184
  %v186 = vpop.f32.mrf.mxu0
  %187 = vmatprep.mubr.bf16.mxu0 0
  %188 = vmatmul.mubr.bf16.gmra.mxu0 %v127
  %v189 = vpop.f32.mrf.mxu0
  %v190 = vadd.f32 %v56, %v189
  %v191 = vpop.f32.mrf.mxu0
  %v192 = vpop.f32.mrf.mxu0
  %v193 = vadd.f32 %v56, %v192
  %v194 = vpop.f32.mrf.mxu0
  %195 = vmatprep.mubr.bf16.mxu0 0
  %196 = vmatmul.mubr.bf16.gmra.mxu0 %v130
  %v197 = vpop.f32.mrf.mxu0
  %v198 = vadd.f32 %v56, %v197
  %v199 = vpop.f32.mrf.mxu0
  %v200 = vpop.f32.mrf.mxu0
  %v201 = vadd.f32 %v56, %v200
  %v202 = vpop.f32.mrf.mxu0
  %203 = vmatprep.mubr.bf16.mxu0 0
  %204 = vmatmul.mubr.bf16.gmra.mxu0 %v133
  %v205 = vpop.f32.mrf.mxu0
  %v206 = vadd.f32 %v56, %v205
  %v207 = vpop.f32.mrf.mxu0
  %v208 = vpop.f32.mrf.mxu0
  %v209 = vadd.f32 %v56, %v208
  %v210 = vpop.f32.mrf.mxu0
  %211 = vmatprep.mubr.bf16.mxu0 0
  %212 = vmatmul.mubr.bf16.gmra.mxu0 %v136
  %v213 = vpop.f32.mrf.mxu0
  %v214 = vadd.f32 %v56, %v213
  %v215 = vpop.f32.mrf.mxu0
  %v216 = vpop.f32.mrf.mxu0
  %v217 = vadd.f32 %v56, %v216
  %v218 = vpop.f32.mrf.mxu0
  %219 = vmatprep.mubr.bf16.mxu0 0
  %220 = vmatmul.mubr.bf16.gmra.mxu0 %v139
  %v221 = vpop.f32.mrf.mxu0
  %v222 = vadd.f32 %v56, %v221
  %v223 = vpop.f32.mrf.mxu0
  %v224 = vpop.f32.mrf.mxu0
  %v225 = vadd.f32 %v56, %v224
  %v226 = vpop.f32.mrf.mxu0
  %227 = vmatprep.mubr.bf16.mxu0 0
  %228 = vmatmul.mubr.bf16.gmra.mxu0 %v142
  %v229 = vpop.f32.mrf.mxu0
  %v230 = vadd.f32 %v56, %v229
  %v231 = vpop.f32.mrf.mxu0
  %v232 = vpop.f32.mrf.mxu0
  %v233 = vadd.f32 %v56, %v232
  %v234 = vpop.f32.mrf.mxu0
  %235 = vmatprep.mubr.bf16.mxu0 0
  %236 = vmatmul.mubr.bf16.gmra.mxu0 %v145
  %v237 = vpop.f32.mrf.mxu0
  %v238 = vadd.f32 %v56, %v237
  %v239 = vpop.f32.mrf.mxu0
  %v240 = vpop.f32.mrf.mxu0
  %v241 = vadd.f32 %v56, %v240
  %v242 = vpop.f32.mrf.mxu0
  %243 = vdwg.mxu0
  %v244 = vmax.f32 %v182, 0.0
  %v245 = vmax.f32 %v185, 0.0
  %v246 = vmax.f32 %v190, 0.0
  %v247 = vmax.f32 %v193, 0.0
  %v248 = vmax.f32 %v198, 0.0
  %v249 = vmax.f32 %v201, 0.0
  %v250 = vmax.f32 %v206, 0.0
  %v251 = vmax.f32 %v209, 0.0
  %v252 = vmax.f32 %v214, 0.0
  %v253 = vmax.f32 %v217, 0.0
  %v254 = vmax.f32 %v222, 0.0
  %v255 = vmax.f32 %v225, 0.0
  %v256 = vmax.f32 %v230, 0.0
  %v257 = vmax.f32 %v233, 0.0
  %v258 = vmax.f32 %v238, 0.0
  %v259 = vmax.f32 %v241, 0.0
  %v260 = vpack.c.bf16 %v245, %v244
  %v261 = vpack.c.bf16 %v247, %v246
  %v262 = vpack.c.bf16 %v249, %v248
  %v263 = vpack.c.bf16 %v251, %v250
  %v264 = vpack.c.bf16 %v253, %v252
  %v265 = vpack.c.bf16 %v255, %v254
  %v266 = vpack.c.bf16 %v257, %v256
  %v267 = vpack.c.bf16 %v259, %v258
  %v268 = vld [vmem:[%s3] sm:$0xf]
  %v269 = vld [vmem:[%s3 + $0x4] sm:$0xf]
  %v270 = vld [vmem:[%s3 + $0x8] sm:$0xf]
  %v271 = vld [vmem:[%s3 + $0xc] sm:$0xf]
  %v272 = vld [vmem:[%s3 + $0x10] sm:$0xf]
  %v273 = vld [vmem:[%s3 + $0x14] sm:$0xf]
  %v274 = vld [vmem:[%s3 + $0x18] sm:$0xf]
  %v275 = vld [vmem:[%s3 + $0x1c] sm:$0xf]
  %v276 = vld [vmem:[%s3 + $0x20] sm:$0xf]
  %v277 = vld [vmem:[%s3 + $0x24] sm:$0xf]
  %v278 = vld [vmem:[%s3 + $0x28] sm:$0xf]
  %v279 = vld [vmem:[%s3 + $0x2c] sm:$0xf]
  %v280 = vld [vmem:[%s3 + $0x30] sm:$0xf]
  %v281 = vld [vmem:[%s3 + $0x34] sm:$0xf]
  %v282 = vld [vmem:[%s3 + $0x38] sm:$0xf]
  %v283 = vld [vmem:[%s3 + $0x3c] sm:$0xf]
  %v284 = vld [vmem:[%s4] sm:$0x1]
  %v286 = vlaneseq
  %v287 = vshrl.u32 %v286, 7
  %v288 = vsub.s32 0, %v287
  %v289 = vrot.slane %v284, %v288
  %v307 = vunpack.c.l.b16 %v268
  %v308 = vunpack.c.l.b16 %v269
  %v309 = vunpack.c.l.b16 %v270
  %v310 = vunpack.c.l.b16 %v271
  %v311 = vunpack.c.l.b16 %v272
  %v312 = vunpack.c.l.b16 %v273
  %v313 = vunpack.c.l.b16 %v274
  %v314 = vunpack.c.l.b16 %v275
  %v315 = vunpack.c.l.b16 %v276
  %v316 = vunpack.c.l.b16 %v277
  %v317 = vunpack.c.l.b16 %v278
  %v318 = vunpack.c.l.b16 %v279
  %v319 = vunpack.c.l.b16 %v280
  %v320 = vunpack.c.l.b16 %v281
  %v321 = vunpack.c.l.b16 %v282
  %v322 = vunpack.c.l.b16 %v283
  %v323 = vpack.c.b16 %v308, %v307
  %v324 = vpack.c.b16 %v310, %v309
  %v325 = vpack.c.b16 %v312, %v311
  %v326 = vpack.c.b16 %v314, %v313
  %v327 = vpack.c.b16 %v316, %v315
  %v328 = vpack.c.b16 %v318, %v317
  %v329 = vpack.c.b16 %v320, %v319
  %v330 = vpack.c.b16 %v322, %v321
  %339 = vmatprep.subr.bf16.mxu0 0
  %340 = vmatpush1.bf16.msra.mxu0 %v330
  %341 = vmatprep.subr.bf16.mxu0 0
  %342 = vmatpush1.bf16.msra.mxu0 %v329
  %343 = vmatprep.subr.bf16.mxu0 0
  %344 = vmatpush1.bf16.msra.mxu0 %v328
  %345 = vmatprep.subr.bf16.mxu0 0
  %346 = vmatpush1.bf16.msra.mxu0 %v327
  %347 = vmatprep.subr.bf16.mxu0 0
  %348 = vmatpush1.bf16.msra.mxu0 %v326
  %349 = vmatprep.subr.bf16.mxu0 0
  %350 = vmatpush1.bf16.msra.mxu0 %v325
  %351 = vmatprep.subr.bf16.mxu0 0
  %352 = vmatpush1.bf16.msra.mxu0 %v324
  %353 = vmatprep.subr.bf16.mxu0 0
  %354 = vmatpush1.bf16.msra.mxu0 %v323
  %355 = vmatprep.subr.bf16.mxu0 0
  %356 = vmatpush2.bf16.msra.mxu0 0
  %357 = vmatprep.subr.bf16.mxu0 0
  %358 = vmatpush2.bf16.msra.mxu0 0
  %359 = vmatprep.subr.bf16.mxu0 0
  %360 = vmatpush2.bf16.msra.mxu0 0
  %361 = vmatprep.subr.bf16.mxu0 0
  %362 = vmatpush2.bf16.msra.mxu0 0
  %363 = vmatprep.subr.bf16.mxu0 0
  %364 = vmatpush2.bf16.msra.mxu0 0
  %365 = vmatprep.subr.bf16.mxu0 0
  %366 = vmatpush2.bf16.msra.mxu0 0
  %367 = vmatprep.subr.bf16.mxu0 0
  %368 = vmatpush2.bf16.msra.mxu0 0
  %369 = vmatprep.subr.bf16.mxu0 0
  %370 = vmatpush2.bf16.msra.mxu0 0
  %371 = vmatprep.mubr.bf16.mxu0 0
  %372 = vmatmul.mubr.bf16.gmra.mxu0 %v260
  %v373 = vpop.f32.mrf.mxu0
  %v374 = vadd.f32 %v289, %v373
  %v375 = vpop.f32.mrf.mxu0
  %v376 = vpop.f32.mrf.mxu0
  %v377 = vadd.f32 %v289, %v376
  %v378 = vpop.f32.mrf.mxu0
  %379 = vmatprep.mubr.bf16.mxu0 0
  %380 = vmatmul.mubr.bf16.gmra.mxu0 %v261
  %v381 = vpop.f32.mrf.mxu0
  %v382 = vadd.f32 %v289, %v381
  %v383 = vpop.f32.mrf.mxu0
  %v384 = vpop.f32.mrf.mxu0
  %v385 = vadd.f32 %v289, %v384
  %v386 = vpop.f32.mrf.mxu0
  %387 = vmatprep.mubr.bf16.mxu0 0
  %388 = vmatmul.mubr.bf16.gmra.mxu0 %v262
  %v389 = vpop.f32.mrf.mxu0
  %v390 = vadd.f32 %v289, %v389
  %v391 = vpop.f32.mrf.mxu0
  %v392 = vpop.f32.mrf.mxu0
  %v393 = vadd.f32 %v289, %v392
  %v394 = vpop.f32.mrf.mxu0
  %395 = vmatprep.mubr.bf16.mxu0 0
  %396 = vmatmul.mubr.bf16.gmra.mxu0 %v263
  %v397 = vpop.f32.mrf.mxu0
  %v398 = vadd.f32 %v289, %v397
  %v399 = vpop.f32.mrf.mxu0
  %v400 = vpop.f32.mrf.mxu0
  %v401 = vadd.f32 %v289, %v400
  %v402 = vpop.f32.mrf.mxu0
  %403 = vmatprep.mubr.bf16.mxu0 0
  %404 = vmatmul.mubr.bf16.gmra.mxu0 %v264
  %v405 = vpop.f32.mrf.mxu0
  %v406 = vadd.f32 %v289, %v405
  %v407 = vpop.f32.mrf.mxu0
  %v408 = vpop.f32.mrf.mxu0
  %v409 = vadd.f32 %v289, %v408
  %v410 = vpop.f32.mrf.mxu0
  %411 = vmatprep.mubr.bf16.mxu0 0
  %412 = vmatmul.mubr.bf16.gmra.mxu0 %v265
  %v413 = vpop.f32.mrf.mxu0
  %v414 = vadd.f32 %v289, %v413
  %v415 = vpop.f32.mrf.mxu0
  %v416 = vpop.f32.mrf.mxu0
  %v417 = vadd.f32 %v289, %v416
  %v418 = vpop.f32.mrf.mxu0
  %419 = vmatprep.mubr.bf16.mxu0 0
  %420 = vmatmul.mubr.bf16.gmra.mxu0 %v266
  %v421 = vpop.f32.mrf.mxu0
  %v422 = vadd.f32 %v289, %v421
  %v423 = vpop.f32.mrf.mxu0
  %v424 = vpop.f32.mrf.mxu0
  %v425 = vadd.f32 %v289, %v424
  %v426 = vpop.f32.mrf.mxu0
  %427 = vmatprep.mubr.bf16.mxu0 0
  %428 = vmatmul.mubr.bf16.gmra.mxu0 %v267
  %v429 = vpop.f32.mrf.mxu0
  %v430 = vadd.f32 %v289, %v429
  %v431 = vpop.f32.mrf.mxu0
  %v432 = vpop.f32.mrf.mxu0
  %v433 = vadd.f32 %v289, %v432
  %v434 = vpop.f32.mrf.mxu0
  %435 = vdwg.mxu0
  %v436 = vmax.f32 %v374, 0.0
  %v437 = vmax.f32 %v377, 0.0
  %v438 = vmax.f32 %v382, 0.0
  %v439 = vmax.f32 %v385, 0.0
  %v440 = vmax.f32 %v390, 0.0
  %v441 = vmax.f32 %v393, 0.0
  %v442 = vmax.f32 %v398, 0.0
  %v443 = vmax.f32 %v401, 0.0
  %v444 = vmax.f32 %v406, 0.0
  %v445 = vmax.f32 %v409, 0.0
  %v446 = vmax.f32 %v414, 0.0
  %v447 = vmax.f32 %v417, 0.0
  %v448 = vmax.f32 %v422, 0.0
  %v449 = vmax.f32 %v425, 0.0
  %v450 = vmax.f32 %v430, 0.0
  %v451 = vmax.f32 %v433, 0.0
  %v452 = vpack.c.bf16 %v437, %v436
  %v453 = vpack.c.bf16 %v439, %v438
  %v454 = vpack.c.bf16 %v441, %v440
  %v455 = vpack.c.bf16 %v443, %v442
  %v456 = vpack.c.bf16 %v445, %v444
  %v457 = vpack.c.bf16 %v447, %v446
  %v458 = vpack.c.bf16 %v449, %v448
  %v459 = vpack.c.bf16 %v451, %v450
  %v460 = vld [vmem:[%s5] sm:$0xf]
  %v461 = vld [vmem:[%s5 + $0x4] sm:$0xf]
  %v462 = vld [vmem:[%s5 + $0x8] sm:$0xf]
  %v463 = vld [vmem:[%s5 + $0xc] sm:$0xf]
  %v464 = vld [vmem:[%s5 + $0x10] sm:$0xf]
  %v465 = vld [vmem:[%s5 + $0x14] sm:$0xf]
  %v466 = vld [vmem:[%s5 + $0x18] sm:$0xf]
  %v467 = vld [vmem:[%s5 + $0x1c] sm:$0xf]
  %v468 = vld [vmem:[%s5 + $0x20] sm:$0xf]
  %v469 = vld [vmem:[%s5 + $0x24] sm:$0xf]
  %v470 = vld [vmem:[%s5 + $0x28] sm:$0xf]
  %v471 = vld [vmem:[%s5 + $0x2c] sm:$0xf]
  %v472 = vld [vmem:[%s5 + $0x30] sm:$0xf]
  %v473 = vld [vmem:[%s5 + $0x34] sm:$0xf]
  %v474 = vld [vmem:[%s5 + $0x38] sm:$0xf]
  %v475 = vld [vmem:[%s5 + $0x3c] sm:$0xf]
  %v476 = vld [vmem:[%s6] sm:$0x1]
  %v478 = vlaneseq
  %v479 = vshrl.u32 %v478, 7
  %v480 = vsub.s32 0, %v479
  %v481 = vrot.slane %v476, %v480
  %v499 = vunpack.c.l.b16 %v460
  %v500 = vunpack.c.l.b16 %v461
  %v501 = vunpack.c.l.b16 %v462
  %v502 = vunpack.c.l.b16 %v463
  %v503 = vunpack.c.l.b16 %v464
  %v504 = vunpack.c.l.b16 %v465
  %v505 = vunpack.c.l.b16 %v466
  %v506 = vunpack.c.l.b16 %v467
  %v507 = vunpack.c.l.b16 %v468
  %v508 = vunpack.c.l.b16 %v469
  %v509 = vunpack.c.l.b16 %v470
  %v510 = vunpack.c.l.b16 %v471
  %v511 = vunpack.c.l.b16 %v472
  %v512 = vunpack.c.l.b16 %v473
  %v513 = vunpack.c.l.b16 %v474
  %v514 = vunpack.c.l.b16 %v475
  %v515 = vpack.c.b16 %v500, %v499
  %v516 = vpack.c.b16 %v502, %v501
  %v517 = vpack.c.b16 %v504, %v503
  %v518 = vpack.c.b16 %v506, %v505
  %v519 = vpack.c.b16 %v508, %v507
  %v520 = vpack.c.b16 %v510, %v509
  %v521 = vpack.c.b16 %v512, %v511
  %v522 = vpack.c.b16 %v514, %v513
  %531 = vmatprep.subr.bf16.mxu0 0
  %532 = vmatpush1.bf16.msra.mxu0 %v522
  %533 = vmatprep.subr.bf16.mxu0 0
  %534 = vmatpush1.bf16.msra.mxu0 %v521
  %535 = vmatprep.subr.bf16.mxu0 0
  %536 = vmatpush1.bf16.msra.mxu0 %v520
  %537 = vmatprep.subr.bf16.mxu0 0
  %538 = vmatpush1.bf16.msra.mxu0 %v519
  %539 = vmatprep.subr.bf16.mxu0 0
  %540 = vmatpush1.bf16.msra.mxu0 %v518
  %541 = vmatprep.subr.bf16.mxu0 0
  %542 = vmatpush1.bf16.msra.mxu0 %v517
  %543 = vmatprep.subr.bf16.mxu0 0
  %544 = vmatpush1.bf16.msra.mxu0 %v516
  %545 = vmatprep.subr.bf16.mxu0 0
  %546 = vmatpush1.bf16.msra.mxu0 %v515
  %547 = vmatprep.subr.bf16.mxu0 0
  %548 = vmatpush2.bf16.msra.mxu0 0
  %549 = vmatprep.subr.bf16.mxu0 0
  %550 = vmatpush2.bf16.msra.mxu0 0
  %551 = vmatprep.subr.bf16.mxu0 0
  %552 = vmatpush2.bf16.msra.mxu0 0
  %553 = vmatprep.subr.bf16.mxu0 0
  %554 = vmatpush2.bf16.msra.mxu0 0
  %555 = vmatprep.subr.bf16.mxu0 0
  %556 = vmatpush2.bf16.msra.mxu0 0
  %557 = vmatprep.subr.bf16.mxu0 0
  %558 = vmatpush2.bf16.msra.mxu0 0
  %559 = vmatprep.subr.bf16.mxu0 0
  %560 = vmatpush2.bf16.msra.mxu0 0
  %561 = vmatprep.subr.bf16.mxu0 0
  %562 = vmatpush2.bf16.msra.mxu0 0
  %563 = vmatprep.mubr.bf16.mxu0 0
  %564 = vmatmul.mubr.bf16.gmra.mxu0 %v452
  %v565 = vpop.f32.mrf.mxu0
  %v566 = vadd.f32 %v481, %v565
  %v567 = vpop.f32.mrf.mxu0
  %v568 = vpop.f32.mrf.mxu0
  %v569 = vadd.f32 %v481, %v568
  %v570 = vpop.f32.mrf.mxu0
  %571 = vmatprep.mubr.bf16.mxu0 0
  %572 = vmatmul.mubr.bf16.gmra.mxu0 %v453
  %v573 = vpop.f32.mrf.mxu0
  %v574 = vadd.f32 %v481, %v573
  %v575 = vpop.f32.mrf.mxu0
  %v576 = vpop.f32.mrf.mxu0
  %v577 = vadd.f32 %v481, %v576
  %v578 = vpop.f32.mrf.mxu0
  %579 = vmatprep.mubr.bf16.mxu0 0
  %580 = vmatmul.mubr.bf16.gmra.mxu0 %v454
  %v581 = vpop.f32.mrf.mxu0
  %v582 = vadd.f32 %v481, %v581
  %v583 = vpop.f32.mrf.mxu0
  %v584 = vpop.f32.mrf.mxu0
  %v585 = vadd.f32 %v481, %v584
  %v586 = vpop.f32.mrf.mxu0
  %587 = vmatprep.mubr.bf16.mxu0 0
  %588 = vmatmul.mubr.bf16.gmra.mxu0 %v455
  %v589 = vpop.f32.mrf.mxu0
  %v590 = vadd.f32 %v481, %v589
  %v591 = vpop.f32.mrf.mxu0
  %v592 = vpop.f32.mrf.mxu0
  %v593 = vadd.f32 %v481, %v592
  %v594 = vpop.f32.mrf.mxu0
  %595 = vmatprep.mubr.bf16.mxu0 0
  %596 = vmatmul.mubr.bf16.gmra.mxu0 %v456
  %v597 = vpop.f32.mrf.mxu0
  %v598 = vadd.f32 %v481, %v597
  %v599 = vpop.f32.mrf.mxu0
  %v600 = vpop.f32.mrf.mxu0
  %v601 = vadd.f32 %v481, %v600
  %v602 = vpop.f32.mrf.mxu0
  %603 = vmatprep.mubr.bf16.mxu0 0
  %604 = vmatmul.mubr.bf16.gmra.mxu0 %v457
  %v605 = vpop.f32.mrf.mxu0
  %v606 = vadd.f32 %v481, %v605
  %v607 = vpop.f32.mrf.mxu0
  %v608 = vpop.f32.mrf.mxu0
  %v609 = vadd.f32 %v481, %v608
  %v610 = vpop.f32.mrf.mxu0
  %611 = vmatprep.mubr.bf16.mxu0 0
  %612 = vmatmul.mubr.bf16.gmra.mxu0 %v458
  %v613 = vpop.f32.mrf.mxu0
  %v614 = vadd.f32 %v481, %v613
  %v615 = vpop.f32.mrf.mxu0
  %v616 = vpop.f32.mrf.mxu0
  %v617 = vadd.f32 %v481, %v616
  %v618 = vpop.f32.mrf.mxu0
  %619 = vmatprep.mubr.bf16.mxu0 0
  %620 = vmatmul.mubr.bf16.gmra.mxu0 %v459
  %v621 = vpop.f32.mrf.mxu0
  %v622 = vadd.f32 %v481, %v621
  %v623 = vpop.f32.mrf.mxu0
  %v624 = vpop.f32.mrf.mxu0
  %v625 = vadd.f32 %v481, %v624
  %v626 = vpop.f32.mrf.mxu0
  %627 = vdwg.mxu0
  %v628 = vxor.u32 %v566, 2147483648
  %v629 = vxor.u32 %v569, 2147483648
  %v630 = vxor.u32 %v574, 2147483648
  %v631 = vxor.u32 %v577, 2147483648
  %v632 = vxor.u32 %v582, 2147483648
  %v633 = vxor.u32 %v585, 2147483648
  %v634 = vxor.u32 %v590, 2147483648
  %v635 = vxor.u32 %v593, 2147483648
  %v636 = vxor.u32 %v598, 2147483648
  %v637 = vxor.u32 %v601, 2147483648
  %v638 = vxor.u32 %v606, 2147483648
  %v639 = vxor.u32 %v609, 2147483648
  %v640 = vxor.u32 %v614, 2147483648
  %v641 = vxor.u32 %v617, 2147483648
  %v642 = vxor.u32 %v622, 2147483648
  %v643 = vxor.u32 %v625, 2147483648
  %v644 = vmul.f32 %v628, 1.442695
  %v645 = vpow.pop %v644
  %v646 = vmul.f32 %v629, 1.442695
  %v647 = vpow.pop %v646
  %v648 = vmul.f32 %v630, 1.442695
  %v649 = vpow.pop %v648
  %v650 = vmul.f32 %v631, 1.442695
  %v651 = vpow.pop %v650
  %v652 = vmul.f32 %v632, 1.442695
  %v653 = vpow.pop %v652
  %v654 = vmul.f32 %v633, 1.442695
  %v655 = vpow.pop %v654
  %v656 = vmul.f32 %v634, 1.442695
  %v657 = vpow.pop %v656
  %v658 = vmul.f32 %v635, 1.442695
  %v659 = vpow.pop %v658
  %v660 = vmul.f32 %v636, 1.442695
  %v661 = vpow.pop %v660
  %v662 = vmul.f32 %v637, 1.442695
  %v663 = vpow.pop %v662
  %v664 = vmul.f32 %v638, 1.442695
  %v665 = vpow.pop %v664
  %v666 = vmul.f32 %v639, 1.442695
  %v667 = vpow.pop %v666
  %v668 = vmul.f32 %v640, 1.442695
  %v669 = vpow.pop %v668
  %v670 = vmul.f32 %v641, 1.442695
  %v671 = vpow.pop %v670
  %v672 = vmul.f32 %v642, 1.442695
  %v673 = vpow.pop %v672
  %v674 = vmul.f32 %v643, 1.442695
  %v675 = vpow.pop %v674
  %v676 = vadd.f32 %v645, 1.0
  %v677 = vadd.f32 %v647, 1.0
  %v678 = vadd.f32 %v649, 1.0
  %v679 = vadd.f32 %v651, 1.0
  %v680 = vadd.f32 %v653, 1.0
  %v681 = vadd.f32 %v655, 1.0
  %v682 = vadd.f32 %v657, 1.0
  %v683 = vadd.f32 %v659, 1.0
  %v684 = vadd.f32 %v661, 1.0
  %v685 = vadd.f32 %v663, 1.0
  %v686 = vadd.f32 %v665, 1.0
  %v687 = vadd.f32 %v667, 1.0
  %v688 = vadd.f32 %v669, 1.0
  %v689 = vadd.f32 %v671, 1.0
  %v690 = vadd.f32 %v673, 1.0
  %v691 = vadd.f32 %v675, 1.0
  %v692 = vrcp.pop %v676
  %v693 = vmul.f32 1.0, %v692
  %v694 = vrcp.pop %v677
  %v695 = vmul.f32 1.0, %v694
  %v696 = vrcp.pop %v678
  %v697 = vmul.f32 1.0, %v696
  %v698 = vrcp.pop %v679
  %v699 = vmul.f32 1.0, %v698
  %v700 = vrcp.pop %v680
  %v701 = vmul.f32 1.0, %v700
  %v702 = vrcp.pop %v681
  %v703 = vmul.f32 1.0, %v702
  %v704 = vrcp.pop %v682
  %v705 = vmul.f32 1.0, %v704
  %v706 = vrcp.pop %v683
  %v707 = vmul.f32 1.0, %v706
  %v708 = vrcp.pop %v684
  %v709 = vmul.f32 1.0, %v708
  %v710 = vrcp.pop %v685
  %v711 = vmul.f32 1.0, %v710
  %v712 = vrcp.pop %v686
  %v713 = vmul.f32 1.0, %v712
  %v714 = vrcp.pop %v687
  %v715 = vmul.f32 1.0, %v714
  %v716 = vrcp.pop %v688
  %v717 = vmul.f32 1.0, %v716
  %v718 = vrcp.pop %v689
  %v719 = vmul.f32 1.0, %v718
  %v720 = vrcp.pop %v690
  %v721 = vmul.f32 1.0, %v720
  %v722 = vrcp.pop %v691
  %v723 = vmul.f32 1.0, %v722
  %724 = vst [vmem:[%s7] sm:$0xff] %v693
  %725 = vst [vmem:[%s7 + $0x8] sm:$0xff] %v695
  %726 = vst [vmem:[%s7 + $0x10] sm:$0xff] %v697
  %727 = vst [vmem:[%s7 + $0x18] sm:$0xff] %v699
  %728 = vst [vmem:[%s7 + $0x20] sm:$0xff] %v701
  %729 = vst [vmem:[%s7 + $0x28] sm:$0xff] %v703
  %730 = vst [vmem:[%s7 + $0x30] sm:$0xff] %v705
  %731 = vst [vmem:[%s7 + $0x38] sm:$0xff] %v707
  %732 = vst [vmem:[%s7 + $0x40] sm:$0xff] %v709
  %733 = vst [vmem:[%s7 + $0x48] sm:$0xff] %v711
  %734 = vst [vmem:[%s7 + $0x50] sm:$0xff] %v713
  %735 = vst [vmem:[%s7 + $0x58] sm:$0xff] %v715
  %736 = vst [vmem:[%s7 + $0x60] sm:$0xff] %v717
  %737 = vst [vmem:[%s7 + $0x68] sm:$0xff] %v719
  %738 = vst [vmem:[%s7 + $0x70] sm:$0xff] %v721
  %739 = vst [vmem:[%s7 + $0x78] sm:$0xff] %v723
  // Predicated region
  $region30: #{tactical_analysis_forward.1} parent=0 // pred_check
    _
  $region31: #{tactical_analysis_forward.1} parent=0 // pred_check_branch
    %741 = sbr.rel (0) target = $region33
  $region32: #{tactical_analysis_forward.1} parent=0 // pred_region
    _
  $region33: #{tactical_analysis_forward.1} parent=0 // pred_fallthru
    _
  // Predicated region
  $region34: #{tactical_analysis_forward.1} parent=0 // pred_check
    _
  $region35: #{tactical_analysis_forward.1} parent=0 // pred_check_branch
    %743 = sbr.rel (0) target = $region37
  $region36: #{tactical_analysis_forward.1} parent=0 // pred_region
    _
  $region37: #{tactical_analysis_forward.1} parent=0 // pred_fallthru
    _

</llo_original>
